<compile_context>
chip_gen: v7x
topology: tpu7x:2x2x1
jax: 0.10.0
libtpu: 0.0.40
codegen_flags: <defaults>
</compile_context>

<pallas_src>
import jax
import jax.numpy as jnp
from jax.experimental import pallas as pl
from jax.experimental.pallas import tpu as pltpu  # noqa: F401  (TPU backend)

EPS = 1e-3


def _bn_train_kernel(x_ref, gamma_ref, beta_ref, o_ref):
    # x_ref: (C, HW) -- C on sublanes, HW on lanes.
    x = x_ref[...].astype(jnp.float32)
    _, hw = x.shape
    inv_count = 1.0 / float(hw)

    # One pass over x: per-channel sum and sum of squares (lane/XLU reduces).
    s = jnp.sum(x, axis=-1, keepdims=True)          # (C, 1)
    ssq = jnp.sum(x * x, axis=-1, keepdims=True)    # (C, 1)

    mean = s * inv_count                            # (C, 1)
    # Biased variance via E[x^2] - mean^2, clamped to avoid NaN from rsqrt.
    # (One-pass formula; fine for typical activation ranges.)
    var = jnp.maximum(ssq * inv_count - mean * mean, 0.0)
    inv_std = jax.lax.rsqrt(var + EPS)              # (C, 1)

    # Fold affine params once: y = x * scale + shift.  All operands are
    # (C, 1) -> clean per-sublane lane-broadcast, single FMA-style pass.
    scale = gamma_ref[...] * inv_std                # (C, 1)
    shift = beta_ref[...] - mean * scale            # (C, 1)

    o_ref[...] = (x * scale + shift).astype(o_ref.dtype)


def batchnorm2d_train(x_nchw, gamma, beta):
    """BatchNorm2d forward with training-mode batch statistics; x in NCHW."""
    N, C, H, W = x_nchw.shape
    HW = H * W

    # The module's input is N=1; squeezing it makes (C, HW) a pure view of
    # the NCHW slab (no transpose, no HBM round-trip).
    # TODO(synk): N > 1 needs a (N, C, HW) kernel with an extra axis-0 sum.
    assert N == 1, "kernel specialised to the module's N=1 input"

    x2 = x_nchw.reshape(C, HW)
    g = gamma.reshape(C, 1).astype(jnp.float32)
    b = beta.reshape(C, 1).astype(jnp.float32)

    y2 = pl.pallas_call(
        _bn_train_kernel,
        out_shape=jax.ShapeDtypeStruct((C, HW), x2.dtype),
        in_specs=[
            pl.BlockSpec((C, HW), lambda: (0, 0)),
            pl.BlockSpec((C, 1), lambda: (0, 0)),
            pl.BlockSpec((C, 1), lambda: (0, 0)),
        ],
        out_specs=pl.BlockSpec((C, HW), lambda: (0, 0)),
    )(x2, g, b)

    return y2.reshape(N, C, H, W)


def _reference(x_nchw, gamma, beta):
    mean = jnp.mean(x_nchw, axis=(0, 2, 3), keepdims=True)
    var = jnp.mean((x_nchw - mean) ** 2, axis=(0, 2, 3), keepdims=True)
    return (x_nchw - mean) / jnp.sqrt(var + EPS) * gamma.reshape(1, -1, 1, 1) \
        + beta.reshape(1, -1, 1, 1)


if __name__ == "__main__":
    key = jax.random.PRNGKey(0)
    kx, kg, kb = jax.random.split(key, 3)

    N, C, H, W = 1, 160, 14, 14          # shape implied by the module
    x = jax.random.normal(kx, (N, C, H, W), dtype=jnp.float32)
    # PyTorch default affine params are ones/zeros; use random values so the
    # affine transform is actually exercised.
    gamma = 1.0 + 0.1 * jax.random.normal(kg, (C,), dtype=jnp.float32)
    beta = 0.1 * jax.random.normal(kb, (C,), dtype=jnp.float32)

    y = batchnorm2d_train(x, gamma, beta)
    y = jax.block_until_ready(y)

    y_ref = _reference(x, gamma, beta)
    assert y.shape == (N, C, H, W)
    assert jnp.max(jnp.abs(y - y_ref)) < 2e-4, "mismatch vs reference"

    print("KERNEL_OK")
</pallas_src>

<mosaic_0001>
module attributes {stable_mosaic.version = 11 : i64} {
  func.func @_bn_train_kernel(%arg0: memref<160x196xf32, #tpu.memory_space<vmem>>, %arg1: memref<160x1xf32, #tpu.memory_space<vmem>>, %arg2: memref<160x1xf32, #tpu.memory_space<vmem>>, %arg3: memref<160x196xf32, #tpu.memory_space<vmem>>) attributes {dimension_semantics = [], scalar_prefetch = 0 : i64, scratch_operands = 0 : i64, tpu.core_type = #tpu.core_type<tc>} {
    %c0 = arith.constant 0 : index
    %c0_0 = arith.constant 0 : index
    %0 = vector.load %arg0[%c0, %c0_0] : memref<160x196xf32, #tpu.memory_space<vmem>>, vector<160x196xf32>
    %cst = arith.constant dense<0.000000e+00> : vector<160xf32>
    %1 = vector.multi_reduction <add>, %0, %cst [1] : vector<160x196xf32> to vector<160xf32>
    %2 = vector.shape_cast %1 : vector<160xf32> to vector<160x1xf32>
    %3 = arith.mulf %0, %0 : vector<160x196xf32>
    %cst_1 = arith.constant dense<0.000000e+00> : vector<160xf32>
    %4 = vector.multi_reduction <add>, %3, %cst_1 [1] : vector<160x196xf32> to vector<160xf32>
    %5 = vector.shape_cast %4 : vector<160xf32> to vector<160x1xf32>
    %cst_2 = arith.constant 0.00510204071 : f32
    %6 = vector.broadcast %cst_2 : f32 to vector<160x1xf32>
    %7 = arith.mulf %2, %6 : vector<160x1xf32>
    %cst_3 = arith.constant 0.00510204071 : f32
    %8 = vector.broadcast %cst_3 : f32 to vector<160x1xf32>
    %9 = arith.mulf %5, %8 : vector<160x1xf32>
    %10 = arith.mulf %7, %7 : vector<160x1xf32>
    %11 = arith.subf %9, %10 : vector<160x1xf32>
    %cst_4 = arith.constant 0.000000e+00 : f32
    %12 = vector.broadcast %cst_4 : f32 to vector<160x1xf32>
    %13 = arith.maximumf %11, %12 : vector<160x1xf32>
    %cst_5 = arith.constant 1.000000e-03 : f32
    %14 = vector.broadcast %cst_5 : f32 to vector<160x1xf32>
    %15 = arith.addf %13, %14 : vector<160x1xf32>
    %16 = math.rsqrt %15 : vector<160x1xf32>
    %c0_6 = arith.constant 0 : index
    %c0_7 = arith.constant 0 : index
    %17 = vector.load %arg1[%c0_6, %c0_7] : memref<160x1xf32, #tpu.memory_space<vmem>>, vector<160x1xf32>
    %18 = arith.mulf %17, %16 : vector<160x1xf32>
    %c0_8 = arith.constant 0 : index
    %c0_9 = arith.constant 0 : index
    %19 = vector.load %arg2[%c0_8, %c0_9] : memref<160x1xf32, #tpu.memory_space<vmem>>, vector<160x1xf32>
    %20 = arith.mulf %7, %18 : vector<160x1xf32>
    %21 = arith.subf %19, %20 : vector<160x1xf32>
    %22 = vector.broadcast %18 : vector<160x1xf32> to vector<160x196xf32>
    %23 = arith.mulf %0, %22 : vector<160x196xf32>
    %24 = vector.broadcast %21 : vector<160x1xf32> to vector<160x196xf32>
    %25 = arith.addf %23, %24 : vector<160x196xf32>
    %c0_10 = arith.constant 0 : index
    %c0_11 = arith.constant 0 : index
    %26 = vector.load %arg3[%c0_10, %c0_11] : memref<160x196xf32, #tpu.memory_space<vmem>>, vector<160x196xf32>
    tpu.vector_store %arg3[%c0_10, %c0_11], %25 {strides = array<i32>} : memref<160x196xf32, #tpu.memory_space<vmem>>, vector<160x196xf32>,
    return
  }
}

</mosaic_0001>

<llo_original>
// kernel: tpu_custom_call.1
$region0: #{tpu_custom_call.1}
  #allocation0 [shape = 'u32[]', space=smem, size = 0x4, offset = 0x4, fixed_abs, tag = 'smem constant byte address 0x4 - core index']
  #allocation1 [shape = 'u32[144,128]{1,0:T(1,128)}', space=vmem, size = 0x12000, scoped, tag = 'internal scratch']
  %s0 = inlined_call_operand.vmem [shape: f32[160,196], index: 0, kind: input, shape index: {}]
  %s1 = inlined_call_operand.vmem [shape: f32[160,1], index: 1, kind: input, shape index: {}]
  %s2 = inlined_call_operand.vmem [shape: f32[160,1], index: 2, kind: input, shape index: {}]
  %s3 = inlined_call_operand.hbm [shape: f32[160,196], index: 3, kind: output, shape index: {}]
  %s4 = sld [smem:[#allocation0]]
  $region22: #{tpu_custom_call.1} parent=0
    _
  %s6 = ssub.s32 1, %s4
  %s7 = scalar_select 0, %s6, %s4
  $region1: #{tpu_custom_call.1} parent=0
    #allocation2 [shape = 'u8[163840]{0}', space=vmem, size = 0x28000, scoped, tag = 'output window, operand 0, single buffered']
    #allocation3 [shape = 's32[1]{0}', space=sflag, size = 0x4, scoped, tag = 'scoped memory for tpu_custom_call.1']
    %8 = vsyncpa [#allocation3], 0
    // Predicated region
    $region2: #{tpu_custom_call.1} parent=1 // pred_check
      _
    $region3: #{tpu_custom_call.1} parent=1 // pred_check_branch
      %10 = sbr.rel (0) target = $region5
    $region4: #{tpu_custom_call.1} parent=1 // pred_region
      _
    $region5: #{tpu_custom_call.1} parent=1 // pred_fallthru
      _
    // Predicated region
    $region6: #{tpu_custom_call.1} parent=1 // pred_check
      _
    $region7: #{tpu_custom_call.1} parent=1 // pred_check_branch
      %12 = sbr.rel (0) target = $region9
    $region8: #{tpu_custom_call.1} parent=1 // pred_region
      _
    $region9: #{tpu_custom_call.1} parent=1 // pred_fallthru
      _
    // Predicated region
    $region10: #{tpu_custom_call.1} parent=1 // pred_check
      _
    $region11: #{tpu_custom_call.1} parent=1 // pred_check_branch
      %14 = sbr.rel (0) target = $region13
    $region12: #{tpu_custom_call.1} parent=1 // pred_region
      _
    $region13: #{tpu_custom_call.1} parent=1 // pred_fallthru
      _
    %v15 = vld [vmem:[%s0] sm:$0xff]
    %v16 = vld [vmem:[%s0 + $0x8] sm:$0xff]
    %v17 = vld [vmem:[%s0 + $0x10] sm:$0xff]
    %v18 = vld [vmem:[%s0 + $0x18] sm:$0xff]
    %v19 = vld [vmem:[%s0 + $0x20] sm:$0xff]
    %v20 = vld [vmem:[%s0 + $0x28] sm:$0xff]
    %v21 = vld [vmem:[%s0 + $0x30] sm:$0xff]
    %v22 = vld [vmem:[%s0 + $0x38] sm:$0xff]
    %v23 = vld [vmem:[%s0 + $0x40] sm:$0xff]
    %v24 = vld [vmem:[%s0 + $0x48] sm:$0xff]
    %v25 = vld [vmem:[%s0 + $0x50] sm:$0xff]
    %v26 = vld [vmem:[%s0 + $0x58] sm:$0xff]
    %v27 = vld [vmem:[%s0 + $0x60] sm:$0xff]
    %v28 = vld [vmem:[%s0 + $0x68] sm:$0xff]
    %v29 = vld [vmem:[%s0 + $0x70] sm:$0xff]
    %v30 = vld [vmem:[%s0 + $0x78] sm:$0xff]
    %v31 = vld [vmem:[%s0 + $0x80] sm:$0xff]
    %v32 = vld [vmem:[%s0 + $0x88] sm:$0xff]
    %v33 = vld [vmem:[%s0 + $0x90] sm:$0xff]
    %v34 = vld [vmem:[%s0 + $0x98] sm:$0xff]
    %v35 = vld [vmem:[%s0 + $0xa0] sm:$0xff]
    %v36 = vld [vmem:[%s0 + $0xa8] sm:$0xff]
    %v37 = vld [vmem:[%s0 + $0xb0] sm:$0xff]
    %v38 = vld [vmem:[%s0 + $0xb8] sm:$0xff]
    %v39 = vld [vmem:[%s0 + $0xc0] sm:$0xff]
    %v40 = vld [vmem:[%s0 + $0xc8] sm:$0xff]
    %v41 = vld [vmem:[%s0 + $0xd0] sm:$0xff]
    %v42 = vld [vmem:[%s0 + $0xd8] sm:$0xff]
    %v43 = vld [vmem:[%s0 + $0xe0] sm:$0xff]
    %v44 = vld [vmem:[%s0 + $0xe8] sm:$0xff]
    %v45 = vld [vmem:[%s0 + $0xf0] sm:$0xff]
    %v46 = vld [vmem:[%s0 + $0xf8] sm:$0xff]
    %v47 = vld [vmem:[%s0 + $0x100] sm:$0xff]
    %v48 = vld [vmem:[%s0 + $0x108] sm:$0xff]
    %v49 = vld [vmem:[%s0 + $0x110] sm:$0xff]
    %v50 = vld [vmem:[%s0 + $0x118] sm:$0xff]
    %v51 = vld [vmem:[%s0 + $0x120] sm:$0xff]
    %v52 = vld [vmem:[%s0 + $0x128] sm:$0xff]
    %v53 = vld [vmem:[%s0 + $0x130] sm:$0xff]
    %v54 = vld [vmem:[%s0 + $0x138] sm:$0xff]
    %vm55 = vcmask 556032
    %v56 = vsel %vm55, %v16, 0.0
    %v57 = vadd.f32 %v15, %v56
    %58 = vadd.xlane.f32.xlu0 %v57
    %v59 = vpop.xlane.xlu0 %58
    %v60 = vsel %vm55, %v18, 0.0
    %v61 = vadd.f32 %v17, %v60
    %62 = vadd.xlane.f32.xlu0 %v61
    %v63 = vpop.xlane.xlu0 %62
    %v64 = vsel %vm55, %v20, 0.0
    %v65 = vadd.f32 %v19, %v64
    %66 = vadd.xlane.f32.xlu0 %v65
    %v67 = vpop.xlane.xlu0 %66
    %v68 = vsel %vm55, %v22, 0.0
    %v69 = vadd.f32 %v21, %v68
    %70 = vadd.xlane.f32.xlu0 %v69
    %v71 = vpop.xlane.xlu0 %70
    %v72 = vsel %vm55, %v24, 0.0
    %v73 = vadd.f32 %v23, %v72
    %74 = vadd.xlane.f32.xlu0 %v73
    %v75 = vpop.xlane.xlu0 %74
    %v76 = vsel %vm55, %v26, 0.0
    %v77 = vadd.f32 %v25, %v76
    %78 = vadd.xlane.f32.xlu0 %v77
    %v79 = vpop.xlane.xlu0 %78
    %v80 = vsel %vm55, %v28, 0.0
    %v81 = vadd.f32 %v27, %v80
    %82 = vadd.xlane.f32.xlu0 %v81
    %v83 = vpop.xlane.xlu0 %82
    %v84 = vsel %vm55, %v30, 0.0
    %v85 = vadd.f32 %v29, %v84
    %86 = vadd.xlane.f32.xlu0 %v85
    %v87 = vpop.xlane.xlu0 %86
    %v88 = vsel %vm55, %v32, 0.0
    %v89 = vadd.f32 %v31, %v88
    %90 = vadd.xlane.f32.xlu0 %v89
    %v91 = vpop.xlane.xlu0 %90
    %v92 = vsel %vm55, %v34, 0.0
    %v93 = vadd.f32 %v33, %v92
    %94 = vadd.xlane.f32.xlu0 %v93
    %v95 = vpop.xlane.xlu0 %94
    %v96 = vsel %vm55, %v36, 0.0
    %v97 = vadd.f32 %v35, %v96
    %98 = vadd.xlane.f32.xlu0 %v97
    %v99 = vpop.xlane.xlu0 %98
    %v100 = vsel %vm55, %v38, 0.0
    %v101 = vadd.f32 %v37, %v100
    %102 = vadd.xlane.f32.xlu0 %v101
    %v103 = vpop.xlane.xlu0 %102
    %v104 = vsel %vm55, %v40, 0.0
    %v105 = vadd.f32 %v39, %v104
    %106 = vadd.xlane.f32.xlu0 %v105
    %v107 = vpop.xlane.xlu0 %106
    %v108 = vsel %vm55, %v42, 0.0
    %v109 = vadd.f32 %v41, %v108
    %110 = vadd.xlane.f32.xlu0 %v109
    %v111 = vpop.xlane.xlu0 %110
    %v112 = vsel %vm55, %v44, 0.0
    %v113 = vadd.f32 %v43, %v112
    %114 = vadd.xlane.f32.xlu0 %v113
    %v115 = vpop.xlane.xlu0 %114
    %v116 = vsel %vm55, %v46, 0.0
    %v117 = vadd.f32 %v45, %v116
    %118 = vadd.xlane.f32.xlu0 %v117
    %v119 = vpop.xlane.xlu0 %118
    %v120 = vsel %vm55, %v48, 0.0
    %v121 = vadd.f32 %v47, %v120
    %122 = vadd.xlane.f32.xlu0 %v121
    %v123 = vpop.xlane.xlu0 %122
    %v124 = vsel %vm55, %v50, 0.0
    %v125 = vadd.f32 %v49, %v124
    %126 = vadd.xlane.f32.xlu0 %v125
    %v127 = vpop.xlane.xlu0 %126
    %v128 = vsel %vm55, %v52, 0.0
    %v129 = vadd.f32 %v51, %v128
    %130 = vadd.xlane.f32.xlu0 %v129
    %v131 = vpop.xlane.xlu0 %130
    %v132 = vsel %vm55, %v54, 0.0
    %v133 = vadd.f32 %v53, %v132
    %134 = vadd.xlane.f32.xlu0 %v133
    %v135 = vpop.xlane.xlu0 %134
    %v136 = vmul.f32 %v15, %v15
    %v137 = vmul.f32 %v16, %v16
    %v138 = vmul.f32 %v17, %v17
    %v139 = vmul.f32 %v18, %v18
    %v140 = vmul.f32 %v19, %v19
    %v141 = vmul.f32 %v20, %v20
    %v142 = vmul.f32 %v21, %v21
    %v143 = vmul.f32 %v22, %v22
    %v144 = vmul.f32 %v23, %v23
    %v145 = vmul.f32 %v24, %v24
    %v146 = vmul.f32 %v25, %v25
    %v147 = vmul.f32 %v26, %v26
    %v148 = vmul.f32 %v27, %v27
    %v149 = vmul.f32 %v28, %v28
    %v150 = vmul.f32 %v29, %v29
    %v151 = vmul.f32 %v30, %v30
    %v152 = vmul.f32 %v31, %v31
    %v153 = vmul.f32 %v32, %v32
    %v154 = vmul.f32 %v33, %v33
    %v155 = vmul.f32 %v34, %v34
    %v156 = vmul.f32 %v35, %v35
    %v157 = vmul.f32 %v36, %v36
    %v158 = vmul.f32 %v37, %v37
    %v159 = vmul.f32 %v38, %v38
    %v160 = vmul.f32 %v39, %v39
    %v161 = vmul.f32 %v40, %v40
    %v162 = vmul.f32 %v41, %v41
    %v163 = vmul.f32 %v42, %v42
    %v164 = vmul.f32 %v43, %v43
    %v165 = vmul.f32 %v44, %v44
    %v166 = vmul.f32 %v45, %v45
    %v167 = vmul.f32 %v46, %v46
    %v168 = vmul.f32 %v47, %v47
    %v169 = vmul.f32 %v48, %v48
    %v170 = vmul.f32 %v49, %v49
    %v171 = vmul.f32 %v50, %v50
    %v172 = vmul.f32 %v51, %v51
    %v173 = vmul.f32 %v52, %v52
    %v174 = vmul.f32 %v53, %v53
    %v175 = vmul.f32 %v54, %v54
    %v176 = vsel %vm55, %v137, 0.0
    %v177 = vadd.f32 %v136, %v176
    %178 = vadd.xlane.f32.xlu0 %v177
    %v179 = vpop.xlane.xlu0 %178
    %v180 = vsel %vm55, %v139, 0.0
    %v181 = vadd.f32 %v138, %v180
    %182 = vadd.xlane.f32.xlu0 %v181
    %v183 = vpop.xlane.xlu0 %182
    %v184 = vsel %vm55, %v141, 0.0
    %v185 = vadd.f32 %v140, %v184
    %186 = vadd.xlane.f32.xlu0 %v185
    %v187 = vpop.xlane.xlu0 %186
    %v188 = vsel %vm55, %v143, 0.0
    %v189 = vadd.f32 %v142, %v188
    %190 = vadd.xlane.f32.xlu0 %v189
    %v191 = vpop.xlane.xlu0 %190
    %v192 = vsel %vm55, %v145, 0.0
    %v193 = vadd.f32 %v144, %v192
    %194 = vadd.xlane.f32.xlu0 %v193
    %v195 = vpop.xlane.xlu0 %194
    %v196 = vsel %vm55, %v147, 0.0
    %v197 = vadd.f32 %v146, %v196
    %198 = vadd.xlane.f32.xlu0 %v197
    %v199 = vpop.xlane.xlu0 %198
    %v200 = vsel %vm55, %v149, 0.0
    %v201 = vadd.f32 %v148, %v200
    %202 = vadd.xlane.f32.xlu0 %v201
    %v203 = vpop.xlane.xlu0 %202
    %v204 = vsel %vm55, %v151, 0.0
    %v205 = vadd.f32 %v150, %v204
    %206 = vadd.xlane.f32.xlu0 %v205
    %v207 = vpop.xlane.xlu0 %206
    %v208 = vsel %vm55, %v153, 0.0
    %v209 = vadd.f32 %v152, %v208
    %210 = vadd.xlane.f32.xlu0 %v209
    %v211 = vpop.xlane.xlu0 %210
    %v212 = vsel %vm55, %v155, 0.0
    %v213 = vadd.f32 %v154, %v212
    %214 = vadd.xlane.f32.xlu0 %v213
    %v215 = vpop.xlane.xlu0 %214
    %v216 = vsel %vm55, %v157, 0.0
    %v217 = vadd.f32 %v156, %v216
    %218 = vadd.xlane.f32.xlu0 %v217
    %v219 = vpop.xlane.xlu0 %218
    %v220 = vsel %vm55, %v159, 0.0
    %v221 = vadd.f32 %v158, %v220
    %222 = vadd.xlane.f32.xlu0 %v221
    %v223 = vpop.xlane.xlu0 %222
    %v224 = vsel %vm55, %v161, 0.0
    %v225 = vadd.f32 %v160, %v224
    %226 = vadd.xlane.f32.xlu0 %v225
    %v227 = vpop.xlane.xlu0 %226
    %v228 = vsel %vm55, %v163, 0.0
    %v229 = vadd.f32 %v162, %v228
    %230 = vadd.xlane.f32.xlu0 %v229
    %v231 = vpop.xlane.xlu0 %230
    %v232 = vsel %vm55, %v165, 0.0
    %v233 = vadd.f32 %v164, %v232
    %234 = vadd.xlane.f32.xlu0 %v233
    %v235 = vpop.xlane.xlu0 %234
    %v236 = vsel %vm55, %v167, 0.0
    %v237 = vadd.f32 %v166, %v236
    %238 = vadd.xlane.f32.xlu0 %v237
    %v239 = vpop.xlane.xlu0 %238
    %v240 = vsel %vm55, %v169, 0.0
    %v241 = vadd.f32 %v168, %v240
    %242 = vadd.xlane.f32.xlu0 %v241
    %v243 = vpop.xlane.xlu0 %242
    %v244 = vsel %vm55, %v171, 0.0
    %v245 = vadd.f32 %v170, %v244
    %246 = vadd.xlane.f32.xlu0 %v245
    %v247 = vpop.xlane.xlu0 %246
    %v248 = vsel %vm55, %v173, 0.0
    %v249 = vadd.f32 %v172, %v248
    %250 = vadd.xlane.f32.xlu0 %v249
    %v251 = vpop.xlane.xlu0 %250
    %v252 = vsel %vm55, %v175, 0.0
    %v253 = vadd.f32 %v174, %v252
    %254 = vadd.xlane.f32.xlu0 %v253
    %v255 = vpop.xlane.xlu0 %254
    %v256 = vmul.f32 %v59, 0.0051020407
    %v257 = vmul.f32 %v63, 0.0051020407
    %v258 = vmul.f32 %v67, 0.0051020407
    %v259 = vmul.f32 %v71, 0.0051020407
    %v260 = vmul.f32 %v75, 0.0051020407
    %v261 = vmul.f32 %v79, 0.0051020407
    %v262 = vmul.f32 %v83, 0.0051020407
    %v263 = vmul.f32 %v87, 0.0051020407
    %v264 = vmul.f32 %v91, 0.0051020407
    %v265 = vmul.f32 %v95, 0.0051020407
    %v266 = vmul.f32 %v99, 0.0051020407
    %v267 = vmul.f32 %v103, 0.0051020407
    %v268 = vmul.f32 %v107, 0.0051020407
    %v269 = vmul.f32 %v111, 0.0051020407
    %v270 = vmul.f32 %v115, 0.0051020407
    %v271 = vmul.f32 %v119, 0.0051020407
    %v272 = vmul.f32 %v123, 0.0051020407
    %v273 = vmul.f32 %v127, 0.0051020407
    %v274 = vmul.f32 %v131, 0.0051020407
    %v275 = vmul.f32 %v135, 0.0051020407
    %v276 = vmul.f32 %v179, 0.0051020407
    %v277 = vmul.f32 %v183, 0.0051020407
    %v278 = vmul.f32 %v187, 0.0051020407
    %v279 = vmul.f32 %v191, 0.0051020407
    %v280 = vmul.f32 %v195, 0.0051020407
    %v281 = vmul.f32 %v199, 0.0051020407
    %v282 = vmul.f32 %v203, 0.0051020407
    %v283 = vmul.f32 %v207, 0.0051020407
    %v284 = vmul.f32 %v211, 0.0051020407
    %v285 = vmul.f32 %v215, 0.0051020407
    %v286 = vmul.f32 %v219, 0.0051020407
    %v287 = vmul.f32 %v223, 0.0051020407
    %v288 = vmul.f32 %v227, 0.0051020407
    %v289 = vmul.f32 %v231, 0.0051020407
    %v290 = vmul.f32 %v235, 0.0051020407
    %v291 = vmul.f32 %v239, 0.0051020407
    %v292 = vmul.f32 %v243, 0.0051020407
    %v293 = vmul.f32 %v247, 0.0051020407
    %v294 = vmul.f32 %v251, 0.0051020407
    %v295 = vmul.f32 %v255, 0.0051020407
    %v296 = vmul.f32 %v256, %v256
    %v297 = vmul.f32 %v257, %v257
    %v298 = vmul.f32 %v258, %v258
    %v299 = vmul.f32 %v259, %v259
    %v300 = vmul.f32 %v260, %v260
    %v301 = vmul.f32 %v261, %v261
    %v302 = vmul.f32 %v262, %v262
    %v303 = vmul.f32 %v263, %v263
    %v304 = vmul.f32 %v264, %v264
    %v305 = vmul.f32 %v265, %v265
    %v306 = vmul.f32 %v266, %v266
    %v307 = vmul.f32 %v267, %v267
    %v308 = vmul.f32 %v268, %v268
    %v309 = vmul.f32 %v269, %v269
    %v310 = vmul.f32 %v270, %v270
    %v311 = vmul.f32 %v271, %v271
    %v312 = vmul.f32 %v272, %v272
    %v313 = vmul.f32 %v273, %v273
    %v314 = vmul.f32 %v274, %v274
    %v315 = vmul.f32 %v275, %v275
    %v316 = vsub.f32 %v276, %v296
    %v317 = vsub.f32 %v277, %v297
    %v318 = vsub.f32 %v278, %v298
    %v319 = vsub.f32 %v279, %v299
    %v320 = vsub.f32 %v280, %v300
    %v321 = vsub.f32 %v281, %v301
    %v322 = vsub.f32 %v282, %v302
    %v323 = vsub.f32 %v283, %v303
    %v324 = vsub.f32 %v284, %v304
    %v325 = vsub.f32 %v285, %v305
    %v326 = vsub.f32 %v286, %v306
    %v327 = vsub.f32 %v287, %v307
    %v328 = vsub.f32 %v288, %v308
    %v329 = vsub.f32 %v289, %v309
    %v330 = vsub.f32 %v290, %v310
    %v331 = vsub.f32 %v291, %v311
    %v332 = vsub.f32 %v292, %v312
    %v333 = vsub.f32 %v293, %v313
    %v334 = vsub.f32 %v294, %v314
    %v335 = vsub.f32 %v295, %v315
    %v336 = vmax.f32 %v316, 0.0
    %v337 = vmax.f32 %v317, 0.0
    %v338 = vmax.f32 %v318, 0.0
    %v339 = vmax.f32 %v319, 0.0
    %v340 = vmax.f32 %v320, 0.0
    %v341 = vmax.f32 %v321, 0.0
    %v342 = vmax.f32 %v322, 0.0
    %v343 = vmax.f32 %v323, 0.0
    %v344 = vmax.f32 %v324, 0.0
    %v345 = vmax.f32 %v325, 0.0
    %v346 = vmax.f32 %v326, 0.0
    %v347 = vmax.f32 %v327, 0.0
    %v348 = vmax.f32 %v328, 0.0
    %v349 = vmax.f32 %v329, 0.0
    %v350 = vmax.f32 %v330, 0.0
    %v351 = vmax.f32 %v331, 0.0
    %v352 = vmax.f32 %v332, 0.0
    %v353 = vmax.f32 %v333, 0.0
    %v354 = vmax.f32 %v334, 0.0
    %v355 = vmax.f32 %v335, 0.0
    %v356 = vadd.f32 %v336, 0.001
    %v357 = vadd.f32 %v337, 0.001
    %v358 = vadd.f32 %v338, 0.001
    %v359 = vadd.f32 %v339, 0.001
    %v360 = vadd.f32 %v340, 0.001
    %v361 = vadd.f32 %v341, 0.001
    %v362 = vadd.f32 %v342, 0.001
    %v363 = vadd.f32 %v343, 0.001
    %v364 = vadd.f32 %v344, 0.001
    %v365 = vadd.f32 %v345, 0.001
    %v366 = vadd.f32 %v346, 0.001
    %v367 = vadd.f32 %v347, 0.001
    %v368 = vadd.f32 %v348, 0.001
    %v369 = vadd.f32 %v349, 0.001
    %v370 = vadd.f32 %v350, 0.001
    %v371 = vadd.f32 %v351, 0.001
    %v372 = vadd.f32 %v352, 0.001
    %v373 = vadd.f32 %v353, 0.001
    %v374 = vadd.f32 %v354, 0.001
    %v375 = vadd.f32 %v355, 0.001
    %v376 = vrsqrt.pop %v356
    %v377 = vrsqrt.pop %v357
    %v378 = vrsqrt.pop %v358
    %v379 = vrsqrt.pop %v359
    %v380 = vrsqrt.pop %v360
    %v381 = vrsqrt.pop %v361
    %v382 = vrsqrt.pop %v362
    %v383 = vrsqrt.pop %v363
    %v384 = vrsqrt.pop %v364
    %v385 = vrsqrt.pop %v365
    %v386 = vrsqrt.pop %v366
    %v387 = vrsqrt.pop %v367
    %v388 = vrsqrt.pop %v368
    %v389 = vrsqrt.pop %v369
    %v390 = vrsqrt.pop %v370
    %v391 = vrsqrt.pop %v371
    %v392 = vrsqrt.pop %v372
    %v393 = vrsqrt.pop %v373
    %v394 = vrsqrt.pop %v374
    %v395 = vrsqrt.pop %v375
    %v396 = vld [vmem:[%s1] sm:$0xff]
    %v397 = vld [vmem:[%s1 + $0x8] sm:$0xff]
    %v398 = vld [vmem:[%s1 + $0x10] sm:$0xff]
    %v399 = vld [vmem:[%s1 + $0x18] sm:$0xff]
    %v400 = vld [vmem:[%s1 + $0x20] sm:$0xff]
    %v401 = vld [vmem:[%s1 + $0x28] sm:$0xff]
    %v402 = vld [vmem:[%s1 + $0x30] sm:$0xff]
    %v403 = vld [vmem:[%s1 + $0x38] sm:$0xff]
    %v404 = vld [vmem:[%s1 + $0x40] sm:$0xff]
    %v405 = vld [vmem:[%s1 + $0x48] sm:$0xff]
    %v406 = vld [vmem:[%s1 + $0x50] sm:$0xff]
    %v407 = vld [vmem:[%s1 + $0x58] sm:$0xff]
    %v408 = vld [vmem:[%s1 + $0x60] sm:$0xff]
    %v409 = vld [vmem:[%s1 + $0x68] sm:$0xff]
    %v410 = vld [vmem:[%s1 + $0x70] sm:$0xff]
    %v411 = vld [vmem:[%s1 + $0x78] sm:$0xff]
    %v412 = vld [vmem:[%s1 + $0x80] sm:$0xff]
    %v413 = vld [vmem:[%s1 + $0x88] sm:$0xff]
    %v414 = vld [vmem:[%s1 + $0x90] sm:$0xff]
    %v415 = vld [vmem:[%s1 + $0x98] sm:$0xff]
    %v416 = vmul.f32 %v396, %v376
    %v417 = vmul.f32 %v397, %v377
    %v418 = vmul.f32 %v398, %v378
    %v419 = vmul.f32 %v399, %v379
    %v420 = vmul.f32 %v400, %v380
    %v421 = vmul.f32 %v401, %v381
    %v422 = vmul.f32 %v402, %v382
    %v423 = vmul.f32 %v403, %v383
    %v424 = vmul.f32 %v404, %v384
    %v425 = vmul.f32 %v405, %v385
    %v426 = vmul.f32 %v406, %v386
    %v427 = vmul.f32 %v407, %v387
    %v428 = vmul.f32 %v408, %v388
    %v429 = vmul.f32 %v409, %v389
    %v430 = vmul.f32 %v410, %v390
    %v431 = vmul.f32 %v411, %v391
    %v432 = vmul.f32 %v412, %v392
    %v433 = vmul.f32 %v413, %v393
    %v434 = vmul.f32 %v414, %v394
    %v435 = vmul.f32 %v415, %v395
    %v436 = vld [vmem:[%s2] sm:$0xff]
    %v437 = vld [vmem:[%s2 + $0x8] sm:$0xff]
    %v438 = vld [vmem:[%s2 + $0x10] sm:$0xff]
    %v439 = vld [vmem:[%s2 + $0x18] sm:$0xff]
    %v440 = vld [vmem:[%s2 + $0x20] sm:$0xff]
    %v441 = vld [vmem:[%s2 + $0x28] sm:$0xff]
    %v442 = vld [vmem:[%s2 + $0x30] sm:$0xff]
    %v443 = vld [vmem:[%s2 + $0x38] sm:$0xff]
    %v444 = vld [vmem:[%s2 + $0x40] sm:$0xff]
    %v445 = vld [vmem:[%s2 + $0x48] sm:$0xff]
    %v446 = vld [vmem:[%s2 + $0x50] sm:$0xff]
    %v447 = vld [vmem:[%s2 + $0x58] sm:$0xff]
    %v448 = vld [vmem:[%s2 + $0x60] sm:$0xff]
    %v449 = vld [vmem:[%s2 + $0x68] sm:$0xff]
    %v450 = vld [vmem:[%s2 + $0x70] sm:$0xff]
    %v451 = vld [vmem:[%s2 + $0x78] sm:$0xff]
    %v452 = vld [vmem:[%s2 + $0x80] sm:$0xff]
    %v453 = vld [vmem:[%s2 + $0x88] sm:$0xff]
    %v454 = vld [vmem:[%s2 + $0x90] sm:$0xff]
    %v455 = vld [vmem:[%s2 + $0x98] sm:$0xff]
    %v456 = vmul.f32 %v256, %v416
    %v457 = vmul.f32 %v257, %v417
    %v458 = vmul.f32 %v258, %v418
    %v459 = vmul.f32 %v259, %v419
    %v460 = vmul.f32 %v260, %v420
    %v461 = vmul.f32 %v261, %v421
    %v462 = vmul.f32 %v262, %v422
    %v463 = vmul.f32 %v263, %v423
    %v464 = vmul.f32 %v264, %v424
    %v465 = vmul.f32 %v265, %v425
    %v466 = vmul.f32 %v266, %v426
    %v467 = vmul.f32 %v267, %v427
    %v468 = vmul.f32 %v268, %v428
    %v469 = vmul.f32 %v269, %v429
    %v470 = vmul.f32 %v270, %v430
    %v471 = vmul.f32 %v271, %v431
    %v472 = vmul.f32 %v272, %v432
    %v473 = vmul.f32 %v273, %v433
    %v474 = vmul.f32 %v274, %v434
    %v475 = vmul.f32 %v275, %v435
    %v476 = vsub.f32 %v436, %v456
    %v477 = vsub.f32 %v437, %v457
    %v478 = vsub.f32 %v438, %v458
    %v479 = vsub.f32 %v439, %v459
    %v480 = vsub.f32 %v440, %v460
    %v481 = vsub.f32 %v441, %v461
    %v482 = vsub.f32 %v442, %v462
    %v483 = vsub.f32 %v443, %v463
    %v484 = vsub.f32 %v444, %v464
    %v485 = vsub.f32 %v445, %v465
    %v486 = vsub.f32 %v446, %v466
    %v487 = vsub.f32 %v447, %v467
    %v488 = vsub.f32 %v448, %v468
    %v489 = vsub.f32 %v449, %v469
    %v490 = vsub.f32 %v450, %v470
    %v491 = vsub.f32 %v451, %v471
    %v492 = vsub.f32 %v452, %v472
    %v493 = vsub.f32 %v453, %v473
    %v494 = vsub.f32 %v454, %v474
    %v495 = vsub.f32 %v455, %v475
    %497 = vset.pattern.permute.xlu0 0
    %498 = vperm.xlu0 %497, %v416
    %v499 = vpop.permute.xlu0 %498
    %502 = vset.pattern.permute.xlu0 0
    %503 = vperm.xlu0 %502, %v417
    %v504 = vpop.permute.xlu0 %503
    %507 = vset.pattern.permute.xlu0 0
    %508 = vperm.xlu0 %507, %v418
    %v509 = vpop.permute.xlu0 %508
    %512 = vset.pattern.permute.xlu0 0
    %513 = vperm.xlu0 %512, %v419
    %v514 = vpop.permute.xlu0 %513
    %517 = vset.pattern.permute.xlu0 0
    %518 = vperm.xlu0 %517, %v420
    %v519 = vpop.permute.xlu0 %518
    %522 = vset.pattern.permute.xlu0 0
    %523 = vperm.xlu0 %522, %v421
    %v524 = vpop.permute.xlu0 %523
    %527 = vset.pattern.permute.xlu0 0
    %528 = vperm.xlu0 %527, %v422
    %v529 = vpop.permute.xlu0 %528
    %532 = vset.pattern.permute.xlu0 0
    %533 = vperm.xlu0 %532, %v423
    %v534 = vpop.permute.xlu0 %533
    %537 = vset.pattern.permute.xlu0 0
    %538 = vperm.xlu0 %537, %v424
    %v539 = vpop.permute.xlu0 %538
    %542 = vset.pattern.permute.xlu0 0
    %543 = vperm.xlu0 %542, %v425
    %v544 = vpop.permute.xlu0 %543
    %547 = vset.pattern.permute.xlu0 0
    %548 = vperm.xlu0 %547, %v426
    %v549 = vpop.permute.xlu0 %548
    %552 = vset.pattern.permute.xlu0 0
    %553 = vperm.xlu0 %552, %v427
    %v554 = vpop.permute.xlu0 %553
    %557 = vset.pattern.permute.xlu0 0
    %558 = vperm.xlu0 %557, %v428
    %v559 = vpop.permute.xlu0 %558
    %562 = vset.pattern.permute.xlu0 0
    %563 = vperm.xlu0 %562, %v429
    %v564 = vpop.permute.xlu0 %563
    %567 = vset.pattern.permute.xlu0 0
    %568 = vperm.xlu0 %567, %v430
    %v569 = vpop.permute.xlu0 %568
    %572 = vset.pattern.permute.xlu0 0
    %573 = vperm.xlu0 %572, %v431
    %v574 = vpop.permute.xlu0 %573
    %577 = vset.pattern.permute.xlu0 0
    %578 = vperm.xlu0 %577, %v432
    %v579 = vpop.permute.xlu0 %578
    %582 = vset.pattern.permute.xlu0 0
    %583 = vperm.xlu0 %582, %v433
    %v584 = vpop.permute.xlu0 %583
    %587 = vset.pattern.permute.xlu0 0
    %588 = vperm.xlu0 %587, %v434
    %v589 = vpop.permute.xlu0 %588
    %592 = vset.pattern.permute.xlu0 0
    %593 = vperm.xlu0 %592, %v435
    %v594 = vpop.permute.xlu0 %593
    %v596 = vmul.f32 %v15, %v499
    %v597 = vmul.f32 %v16, %v499
    %v598 = vmul.f32 %v17, %v504
    %v599 = vmul.f32 %v18, %v504
    %v600 = vmul.f32 %v19, %v509
    %v601 = vmul.f32 %v20, %v509
    %v602 = vmul.f32 %v21, %v514
    %v603 = vmul.f32 %v22, %v514
    %v604 = vmul.f32 %v23, %v519
    %v605 = vmul.f32 %v24, %v519
    %v606 = vmul.f32 %v25, %v524
    %v607 = vmul.f32 %v26, %v524
    %v608 = vmul.f32 %v27, %v529
    %v609 = vmul.f32 %v28, %v529
    %v610 = vmul.f32 %v29, %v534
    %v611 = vmul.f32 %v30, %v534
    %v612 = vmul.f32 %v31, %v539
    %v613 = vmul.f32 %v32, %v539
    %v614 = vmul.f32 %v33, %v544
    %v615 = vmul.f32 %v34, %v544
    %v616 = vmul.f32 %v35, %v549
    %v617 = vmul.f32 %v36, %v549
    %v618 = vmul.f32 %v37, %v554
    %v619 = vmul.f32 %v38, %v554
    %v620 = vmul.f32 %v39, %v559
    %v621 = vmul.f32 %v40, %v559
    %v622 = vmul.f32 %v41, %v564
    %v623 = vmul.f32 %v42, %v564
    %v624 = vmul.f32 %v43, %v569
    %v625 = vmul.f32 %v44, %v569
    %v626 = vmul.f32 %v45, %v574
    %v627 = vmul.f32 %v46, %v574
    %v628 = vmul.f32 %v47, %v579
    %v629 = vmul.f32 %v48, %v579
    %v630 = vmul.f32 %v49, %v584
    %v631 = vmul.f32 %v50, %v584
    %v632 = vmul.f32 %v51, %v589
    %v633 = vmul.f32 %v52, %v589
    %v634 = vmul.f32 %v53, %v594
    %v635 = vmul.f32 %v54, %v594
    %637 = vset.pattern.permute.xlu0 0
    %638 = vperm.xlu0 %637, %v476
    %v639 = vpop.permute.xlu0 %638
    %642 = vset.pattern.permute.xlu0 0
    %643 = vperm.xlu0 %642, %v477
    %v644 = vpop.permute.xlu0 %643
    %647 = vset.pattern.permute.xlu0 0
    %648 = vperm.xlu0 %647, %v478
    %v649 = vpop.permute.xlu0 %648
    %652 = vset.pattern.permute.xlu0 0
    %653 = vperm.xlu0 %652, %v479
    %v654 = vpop.permute.xlu0 %653
    %657 = vset.pattern.permute.xlu0 0
    %658 = vperm.xlu0 %657, %v480
    %v659 = vpop.permute.xlu0 %658
    %662 = vset.pattern.permute.xlu0 0
    %663 = vperm.xlu0 %662, %v481
    %v664 = vpop.permute.xlu0 %663
    %667 = vset.pattern.permute.xlu0 0
    %668 = vperm.xlu0 %667, %v482
    %v669 = vpop.permute.xlu0 %668
    %672 = vset.pattern.permute.xlu0 0
    %673 = vperm.xlu0 %672, %v483
    %v674 = vpop.permute.xlu0 %673
    %677 = vset.pattern.permute.xlu0 0
    %678 = vperm.xlu0 %677, %v484
    %v679 = vpop.permute.xlu0 %678
    %682 = vset.pattern.permute.xlu0 0
    %683 = vperm.xlu0 %682, %v485
    %v684 = vpop.permute.xlu0 %683
    %687 = vset.pattern.permute.xlu0 0
    %688 = vperm.xlu0 %687, %v486
    %v689 = vpop.permute.xlu0 %688
    %692 = vset.pattern.permute.xlu0 0
    %693 = vperm.xlu0 %692, %v487
    %v694 = vpop.permute.xlu0 %693
    %697 = vset.pattern.permute.xlu0 0
    %698 = vperm.xlu0 %697, %v488
    %v699 = vpop.permute.xlu0 %698
    %702 = vset.pattern.permute.xlu0 0
    %703 = vperm.xlu0 %702, %v489
    %v704 = vpop.permute.xlu0 %703
    %707 = vset.pattern.permute.xlu0 0
    %708 = vperm.xlu0 %707, %v490
    %v709 = vpop.permute.xlu0 %708
    %712 = vset.pattern.permute.xlu0 0
    %713 = vperm.xlu0 %712, %v491
    %v714 = vpop.permute.xlu0 %713
    %717 = vset.pattern.permute.xlu0 0
    %718 = vperm.xlu0 %717, %v492
    %v719 = vpop.permute.xlu0 %718
    %722 = vset.pattern.permute.xlu0 0
    %723 = vperm.xlu0 %722, %v493
    %v724 = vpop.permute.xlu0 %723
    %727 = vset.pattern.permute.xlu0 0
    %728 = vperm.xlu0 %727, %v494
    %v729 = vpop.permute.xlu0 %728
    %732 = vset.pattern.permute.xlu0 0
    %733 = vperm.xlu0 %732, %v495
    %v734 = vpop.permute.xlu0 %733
    %v736 = vadd.f32 %v596, %v639
    %v737 = vadd.f32 %v597, %v639
    %v738 = vadd.f32 %v598, %v644
    %v739 = vadd.f32 %v599, %v644
    %v740 = vadd.f32 %v600, %v649
    %v741 = vadd.f32 %v601, %v649
    %v742 = vadd.f32 %v602, %v654
    %v743 = vadd.f32 %v603, %v654
    %v744 = vadd.f32 %v604, %v659
    %v745 = vadd.f32 %v605, %v659
    %v746 = vadd.f32 %v606, %v664
    %v747 = vadd.f32 %v607, %v664
    %v748 = vadd.f32 %v608, %v669
    %v749 = vadd.f32 %v609, %v669
    %v750 = vadd.f32 %v610, %v674
    %v751 = vadd.f32 %v611, %v674
    %v752 = vadd.f32 %v612, %v679
    %v753 = vadd.f32 %v613, %v679
    %v754 = vadd.f32 %v614, %v684
    %v755 = vadd.f32 %v615, %v684
    %v756 = vadd.f32 %v616, %v689
    %v757 = vadd.f32 %v617, %v689
    %v758 = vadd.f32 %v618, %v694
    %v759 = vadd.f32 %v619, %v694
    %v760 = vadd.f32 %v620, %v699
    %v761 = vadd.f32 %v621, %v699
    %v762 = vadd.f32 %v622, %v704
    %v763 = vadd.f32 %v623, %v704
    %v764 = vadd.f32 %v624, %v709
    %v765 = vadd.f32 %v625, %v709
    %v766 = vadd.f32 %v626, %v714
    %v767 = vadd.f32 %v627, %v714
    %v768 = vadd.f32 %v628, %v719
    %v769 = vadd.f32 %v629, %v719
    %v770 = vadd.f32 %v630, %v724
    %v771 = vadd.f32 %v631, %v724
    %v772 = vadd.f32 %v632, %v729
    %v773 = vadd.f32 %v633, %v729
    %v774 = vadd.f32 %v634, %v734
    %v775 = vadd.f32 %v635, %v734
    %776 = vst [vmem:[#allocation2] sm:$0xff] %v736
    %777 = vst.msk [vmem:[#allocation2 + $0x8] sm:$0xff] %vm55, %v737
    %778 = vst [vmem:[#allocation2 + $0x10] sm:$0xff] %v738
    %779 = vst.msk [vmem:[#allocation2 + $0x18] sm:$0xff] %vm55, %v739
    %780 = vst [vmem:[#allocation2 + $0x20] sm:$0xff] %v740
    %781 = vst.msk [vmem:[#allocation2 + $0x28] sm:$0xff] %vm55, %v741
    %782 = vst [vmem:[#allocation2 + $0x30] sm:$0xff] %v742
    %783 = vst.msk [vmem:[#allocation2 + $0x38] sm:$0xff] %vm55, %v743
    %784 = vst [vmem:[#allocation2 + $0x40] sm:$0xff] %v744
    %785 = vst.msk [vmem:[#allocation2 + $0x48] sm:$0xff] %vm55, %v745
    %786 = vst [vmem:[#allocation2 + $0x50] sm:$0xff] %v746
    %787 = vst.msk [vmem:[#allocation2 + $0x58] sm:$0xff] %vm55, %v747
    %788 = vst [vmem:[#allocation2 + $0x60] sm:$0xff] %v748
    %789 = vst.msk [vmem:[#allocation2 + $0x68] sm:$0xff] %vm55, %v749
    %790 = vst [vmem:[#allocation2 + $0x70] sm:$0xff] %v750
    %791 = vst.msk [vmem:[#allocation2 + $0x78] sm:$0xff] %vm55, %v751
    %792 = vst [vmem:[#allocation2 + $0x80] sm:$0xff] %v752
    %793 = vst.msk [vmem:[#allocation2 + $0x88] sm:$0xff] %vm55, %v753
    %794 = vst [vmem:[#allocation2 + $0x90] sm:$0xff] %v754
    %795 = vst.msk [vmem:[#allocation2 + $0x98] sm:$0xff] %vm55, %v755
    %796 = vst [vmem:[#allocation2 + $0xa0] sm:$0xff] %v756
    %797 = vst.msk [vmem:[#allocation2 + $0xa8] sm:$0xff] %vm55, %v757
    %798 = vst [vmem:[#allocation2 + $0xb0] sm:$0xff] %v758
    %799 = vst.msk [vmem:[#allocation2 + $0xb8] sm:$0xff] %vm55, %v759
    %800 = vst [vmem:[#allocation2 + $0xc0] sm:$0xff] %v760
    %801 = vst.msk [vmem:[#allocation2 + $0xc8] sm:$0xff] %vm55, %v761
    %802 = vst [vmem:[#allocation2 + $0xd0] sm:$0xff] %v762
    %803 = vst.msk [vmem:[#allocation2 + $0xd8] sm:$0xff] %vm55, %v763
    %804 = vst [vmem:[#allocation2 + $0xe0] sm:$0xff] %v764
    %805 = vst.msk [vmem:[#allocation2 + $0xe8] sm:$0xff] %vm55, %v765
    %806 = vst [vmem:[#allocation2 + $0xf0] sm:$0xff] %v766
    %807 = vst.msk [vmem:[#allocation2 + $0xf8] sm:$0xff] %vm55, %v767
    %808 = vst [vmem:[#allocation2 + $0x100] sm:$0xff] %v768
    %809 = vst.msk [vmem:[#allocation2 + $0x108] sm:$0xff] %vm55, %v769
    %810 = vst [vmem:[#allocation2 + $0x110] sm:$0xff] %v770
    %811 = vst.msk [vmem:[#allocation2 + $0x118] sm:$0xff] %vm55, %v771
    %812 = vst [vmem:[#allocation2 + $0x120] sm:$0xff] %v772
    %813 = vst.msk [vmem:[#allocation2 + $0x128] sm:$0xff] %vm55, %v773
    %814 = vst [vmem:[#allocation2 + $0x130] sm:$0xff] %v774
    %815 = vst.msk [vmem:[#allocation2 + $0x138] sm:$0xff] %vm55, %v775
    // Predicated region
    $region14: #{tpu_custom_call.1} parent=1 // pred_check
      _
    $region15: #{tpu_custom_call.1} parent=1 // pred_check_branch
      %817 = sbr.rel (0) target = $region17
    $region16: #{tpu_custom_call.1} parent=1 // pred_region
      %s819 = ssub.s32 5120, 5120
      %820 = vsyncadd [#allocation3], %s819
      %s821 = sshll.u32 [#allocation2], 4
      %s822 = int_to_ptr.vmem [resolvable:$true] %s821
      %827 = dma.vmem_to_hbm [thread:$0]  %s822, 5120, %s3, [#allocation3], 256, 256, 16
    $region17: #{tpu_custom_call.1} parent=1 // pred_fallthru
      _
    // Predicated region
    $region18: #{tpu_custom_call.1} parent=1 // pred_check
      _
    $region19: #{tpu_custom_call.1} parent=1 // pred_check_branch
      %829 = sbr.rel (0) target = $region21
    $region20: #{tpu_custom_call.1} parent=1 // pred_region
      %830 = dma.done [#allocation3], 5120
    $region21: #{tpu_custom_call.1} parent=1 // pred_fallthru
      _
    %831 = vsyncpa [#allocation3], 1

</llo_original>
